<compile_context>
chip_gen: v5e
topology: v5e:2x2
jax: 0.10.0
libtpu: 0.0.40
codegen_flags: <defaults>
</compile_context>

<pallas_src>
import jax
import jax.numpy as jnp
from jax.experimental import pallas as pl
from jax.experimental.pallas import tpu as pltpu


def _bce_partial_sum_kernel(p_ref, t_ref, out_ref, acc_ref):
    i = pl.program_id(1)  # batch-tile index (reduction axis)
    j = pl.program_id(2)  # vocab-tile index (reduction axis)
    first = jnp.logical_and(i == 0, j == 0)
    last = jnp.logical_and(i == pl.num_programs(1) - 1,
                           j == pl.num_programs(2) - 1)

    @pl.when(first)
    def _():
        acc_ref[...] = jnp.zeros_like(acc_ref)

    p = p_ref[...].astype(jnp.float32)
    t = t_ref[...].astype(jnp.float32)

    # torch.nn.BCELoss semantics: both log terms are clamped at -100.
    log_p = jnp.maximum(jnp.log(p), -100.0)
    log_1mp = jnp.maximum(jnp.log(1.0 - p), -100.0)

    # Accumulate the POSITIVE log-likelihood terms; the single negation is
    # folded into the wrapper's mean.  Rewritten to save one mul + one sub
    # per element vs t*log_p + (1-t)*log_1mp.  Pure VALU adds per step; the
    # cross-lane reduce happens only once, below.
    acc_ref[...] += log_1mp + t * (log_p - log_1mp)

    @pl.when(last)
    def _():
        out_ref[0, 0] = jnp.sum(acc_ref[...])


def _divisor_tile(dim, align, cap):
    """Largest divisor of `dim` that is a multiple of `align` and <= cap.
    Falls back to the full dim when `dim` is not a multiple of `align`
    (Pallas then requires the block to span that whole axis)."""
    if dim % align != 0:
        return dim
    cap = max(align, min(cap, dim))
    best = align
    for t in range(align, cap + 1, align):
        if dim % t == 0:
            best = t
    return best


def _choose_tiles(B, V, max_block_elems):
    """Pick (tile_b, tile_v).  Prefer full vocab rows (tile_v = V) so each
    input DMA is a single contiguous HBM read; shrink tile_b (multiple of 8)
    to fit the element budget.  Only when even an 8-row full-V block exceeds
    the budget do we tile the vocab lane-dense (multiple of 128)."""
    if V % 128 != 0 or 8 * V <= max_block_elems:
        tile_v = V
        if B * V <= max_block_elems or B % 8 != 0:
            tile_b = B
        else:
            tile_b = _divisor_tile(B, 8, max(8, max_block_elems // V))
    else:
        tile_b = 8 if B % 8 == 0 else B
        tile_v = _divisor_tile(V, 128, max(128, max_block_elems // tile_b))
    return tile_b, tile_v


def character_prediction_loss(char_predictions_probs, targets,
                              *, max_block_elems=1024 * 1024):
    """torch.nn.BCELoss()(probs, targets) (mean reduction) as a Pallas TPU kernel.

    char_predictions_probs, targets: (B, V) probability arrays (f32 or bf16;
    bf16 halves HBM traffic -- near-2x on the HBM-bound v5e/v6e).
    Returns a scalar float32 loss identical to the PyTorch module's forward.
    max_block_elems caps a single (tile_b, tile_v) block (default 1M elems =
    4 MiB f32): 2 inputs x 2 pipeline buffers + 1 f32 accumulator ~= 20 MiB,
    inside the 32 MiB scoped VMEM limit on every generation (incl. v7x 64 MiB).
    Inputs are assumed to lie in [0, 1] (torch raises otherwise; here invalid
    inputs are silently handled by the -100 log clamp).
    """
    B, V = char_predictions_probs.shape
    assert targets.shape == (B, V)

    tile_b, tile_v = _choose_tiles(B, V, max_block_elems)
    n_b_tiles = B // tile_b
    n_v_tiles = V // tile_v

    # Robust 2-way split for the v7x dual-TensorCore case: split whichever
    # tile axis has an even count (no-op extra axis on single-core v5e/v6e).
    if n_v_tiles >= 2 and n_v_tiles % 2 == 0:
        n_splits, n_b_grid, n_v_grid = 2, n_b_tiles, n_v_tiles // 2

        def in_map(c, i, j):
            return (i, c * n_v_grid + j)
    elif n_b_tiles >= 2 and n_b_tiles % 2 == 0:
        n_splits, n_b_grid, n_v_grid = 2, n_b_tiles // 2, n_v_tiles

        def in_map(c, i, j):
            return (c * n_b_grid + i, j)
    else:
        n_splits, n_b_grid, n_v_grid = 1, n_b_tiles, n_v_tiles

        def in_map(c, i, j):
            return (i, j)

    grid = (n_splits, n_b_grid, n_v_grid)

    in_itemsize = jnp.dtype(char_predictions_probs.dtype).itemsize
    block_in_bytes = tile_b * tile_v * in_itemsize
    block_acc_bytes = tile_b * tile_v * 4
    # 2 inputs x 2 pipeline buffers + accumulator + slack; clamped so the
    # default stays within every generation's scoped/physical VMEM.
    vmem_limit = min(max(32 * 1024 * 1024,
                         4 * block_in_bytes + block_acc_bytes + (2 << 20)),
                     128 * 1024 * 1024)

    cost = pl.CostEstimate(
        flops=6 * B * V,
        transcendentals=2 * B * V,
        bytes_accessed=2 * B * V * in_itemsize + n_splits * 4,
    )

    partials = pl.pallas_call(
        _bce_partial_sum_kernel,
        out_shape=jax.ShapeDtypeStruct((n_splits, 1), jnp.float32),
        grid_spec=pltpu.PrefetchScalarGridSpec(
            num_scalar_prefetch=0,
            grid=grid,
            in_specs=[
                pl.BlockSpec((tile_b, tile_v), in_map),
                pl.BlockSpec((tile_b, tile_v), in_map),
            ],
            # One scalar partial per split; resident across the (i, j) loop.
            out_specs=pl.BlockSpec((1, 1), lambda c, i, j: (c, 0),
                                   memory_space=pltpu.MemorySpace.SMEM),
            scratch_shapes=[pltpu.VMEM((tile_b, tile_v), jnp.float32)],
        ),
        compiler_params=pltpu.CompilerParams(
            # TODO(synk): switch the leading axis to pltpu.CORE_PARALLEL once
            # verified on v7x hardware; "parallel" is safe on all generations.
            dimension_semantics=("parallel", "arbitrary", "arbitrary"),
            vmem_limit_bytes=vmem_limit,
        ),
        cost_estimate=cost,
    )(char_predictions_probs, targets)

    # Single negation + mean here (sign folded out of the per-element kernel).
    return -jnp.sum(partials) / jnp.float32(B * V)


def _bce_ref(p, t):
    """Pure-JAX reference with torch.nn.BCELoss clamping semantics."""
    p = p.astype(jnp.float32)
    t = t.astype(jnp.float32)
    log_p = jnp.maximum(jnp.log(p), -100.0)
    log_1mp = jnp.maximum(jnp.log(1.0 - p), -100.0)
    return jnp.mean(-(t * log_p + (1.0 - t) * log_1mp))


if __name__ == "__main__":
    key = jax.random.PRNGKey(0)
    k1, k2, k3, k4, k5, k6 = jax.random.split(key, 6)

    # Test 1: module-sized small shape -- batch of 8, 256-char vocab
    # (single full-row block: one grid step, fully contiguous DMAs).
    B, V = 8, 256
    probs = jax.nn.sigmoid(jax.random.normal(k1, (B, V), dtype=jnp.float32))
    targets = jax.nn.one_hot(jax.random.randint(k2, (B,), 0, V), V,
                             dtype=jnp.float32)
    loss = jax.block_until_ready(character_prediction_loss(probs, targets))
    ref = _bce_ref(probs, targets)
    assert jnp.allclose(loss, ref, rtol=1e-4, atol=1e-6), (loss, ref)

    # Test 2: force a tiny block budget so the vocab is tiled lane-dense and
    # the 2-way split engages along the vocab-tile axis.
    B2, V2 = 16, 1024
    probs2 = jax.nn.sigmoid(jax.random.normal(k3, (B2, V2), dtype=jnp.float32))
    targets2 = jax.nn.one_hot(jax.random.randint(k4, (B2,), 0, V2), V2,
                              dtype=jnp.float32)
    loss2 = jax.block_until_ready(
        character_prediction_loss(probs2, targets2, max_block_elems=8 * 128))
    ref2 = _bce_ref(probs2, targets2)
    assert jnp.allclose(loss2, ref2, rtol=1e-4, atol=1e-6), (loss2, ref2)

    # Test 3: bf16 inputs, full-vocab-row tiles, 2-way split along the
    # batch-tile axis (the case the old heuristic left single-core).
    B3, V3 = 64, 256
    probs3 = jax.nn.sigmoid(
        jax.random.normal(k5, (B3, V3), dtype=jnp.float32)).astype(jnp.bfloat16)
    targets3 = jax.nn.one_hot(jax.random.randint(k6, (B3,), 0, V3), V3,
                              dtype=jnp.bfloat16)
    loss3 = jax.block_until_ready(
        character_prediction_loss(probs3, targets3, max_block_elems=8 * 256))
    ref3 = _bce_ref(probs3, targets3)
    assert jnp.allclose(loss3, ref3, rtol=1e-4, atol=1e-6), (loss3, ref3)

    print("KERNEL_OK")
</pallas_src>

<mosaic_0001>
module attributes {stable_mosaic.version = 11 : i64} {
  func.func @_bce_partial_sum_kernel(%arg0: i32, %arg1: i32, %arg2: i32, %arg3: memref<8x256xf32, #tpu.memory_space<vmem>>, %arg4: memref<8x256xf32, #tpu.memory_space<vmem>>, %arg5: memref<1x1xf32, #tpu.memory_space<smem>>, %arg6: memref<8x256xf32, #tpu.memory_space<vmem>>) attributes {dimension_semantics = [#tpu.dimension_semantics<parallel>, #tpu.dimension_semantics<arbitrary>, #tpu.dimension_semantics<arbitrary>], iteration_bounds = array<i64: 1, 1, 1>, scalar_prefetch = 0 : i64, scratch_operands = 1 : i64, tpu.core_type = #tpu.core_type<tc>, window_params = [{transform_indices = @transform_0, window_bounds = array<i64: 8, 256>}, {transform_indices = @transform_1, window_bounds = array<i64: 8, 256>}, {transform_indices = @transform_2, window_bounds = array<i64: 1, 1>}]} {
    %c0_i32 = arith.constant 0 : i32
    %0 = arith.cmpi eq, %arg1, %c0_i32 : i32
    %c0_i32_0 = arith.constant 0 : i32
    %1 = arith.cmpi eq, %arg2, %c0_i32_0 : i32
    %2 = arith.andi %0, %1 : i1
    %c0_i32_1 = arith.constant 0 : i32
    %3 = arith.cmpi eq, %arg1, %c0_i32_1 : i32
    %c0_i32_2 = arith.constant 0 : i32
    %4 = arith.cmpi eq, %arg2, %c0_i32_2 : i32
    %5 = arith.andi %3, %4 : i1
    %6 = arith.extui %2 : i1 to i32
    %c0_i32_3 = arith.constant 0 : i32
    %7 = arith.cmpi ne, %6, %c0_i32_3 : i32
    scf.if %7 {
      %cst_14 = arith.constant 0.000000e+00 : f32
      %26 = vector.broadcast %cst_14 : f32 to vector<8x256xf32>
      %c0_15 = arith.constant 0 : index
      %c0_16 = arith.constant 0 : index
      %27 = vector.load %arg6[%c0_15, %c0_16] : memref<8x256xf32, #tpu.memory_space<vmem>>, vector<8x256xf32>
      tpu.vector_store %arg6[%c0_15, %c0_16], %26 {strides = array<i32>} : memref<8x256xf32, #tpu.memory_space<vmem>>, vector<8x256xf32>,
    } else {
    }
    %c0 = arith.constant 0 : index
    %c0_4 = arith.constant 0 : index
    %8 = vector.load %arg3[%c0, %c0_4] : memref<8x256xf32, #tpu.memory_space<vmem>>, vector<8x256xf32>
    %c0_5 = arith.constant 0 : index
    %c0_6 = arith.constant 0 : index
    %9 = vector.load %arg4[%c0_5, %c0_6] : memref<8x256xf32, #tpu.memory_space<vmem>>, vector<8x256xf32>
    %10 = math.log %8 : vector<8x256xf32>
    %cst = arith.constant -1.000000e+02 : f32
    %11 = vector.broadcast %cst : f32 to vector<8x256xf32>
    %12 = arith.maximumf %10, %11 : vector<8x256xf32>
    %cst_7 = arith.constant 1.000000e+00 : f32
    %13 = vector.broadcast %cst_7 : f32 to vector<8x256xf32>
    %14 = arith.subf %13, %8 : vector<8x256xf32>
    %15 = math.log %14 : vector<8x256xf32>
    %cst_8 = arith.constant -1.000000e+02 : f32
    %16 = vector.broadcast %cst_8 : f32 to vector<8x256xf32>
    %17 = arith.maximumf %15, %16 : vector<8x256xf32>
    %c0_9 = arith.constant 0 : index
    %c0_10 = arith.constant 0 : index
    %18 = vector.load %arg6[%c0_9, %c0_10] : memref<8x256xf32, #tpu.memory_space<vmem>>, vector<8x256xf32>
    %19 = arith.subf %12, %17 : vector<8x256xf32>
    %20 = arith.mulf %9, %19 : vector<8x256xf32>
    %21 = arith.addf %17, %20 : vector<8x256xf32>
    %22 = arith.addf %18, %21 : vector<8x256xf32>
    %c0_11 = arith.constant 0 : index
    %c0_12 = arith.constant 0 : index
    %23 = vector.load %arg6[%c0_11, %c0_12] : memref<8x256xf32, #tpu.memory_space<vmem>>, vector<8x256xf32>
    tpu.vector_store %arg6[%c0_11, %c0_12], %22 {strides = array<i32>} : memref<8x256xf32, #tpu.memory_space<vmem>>, vector<8x256xf32>,
    %24 = arith.extui %5 : i1 to i32
    %c0_i32_13 = arith.constant 0 : i32
    %25 = arith.cmpi ne, %24, %c0_i32_13 : i32
    scf.if %25 {
      %c0_14 = arith.constant 0 : index
      %c0_15 = arith.constant 0 : index
      %26 = vector.load %arg6[%c0_14, %c0_15] : memref<8x256xf32, #tpu.memory_space<vmem>>, vector<8x256xf32>
      %27 = vector.shape_cast %26 : vector<8x256xf32> to vector<1x8x256xf32>
      %cst_16 = arith.constant dense<0.000000e+00> : vector<1xf32>
      %28 = vector.multi_reduction <add>, %27, %cst_16 [1, 2] : vector<1x8x256xf32> to vector<1xf32>
      %29 = vector.shape_cast %28 : vector<1xf32> to vector<1x1x1xf32>
      %30 = vector.extract %29[0, 0, 0] : f32 from vector<1x1x1xf32>
      %c0_17 = arith.constant 0 : index
      %c0_18 = arith.constant 0 : index
      %31 = memref.load %arg5[%c0_17, %c0_18] : memref<1x1xf32, #tpu.memory_space<smem>>
      memref.store %30, %arg5[%c0_17, %c0_18] : memref<1x1xf32, #tpu.memory_space<smem>>
    } else {
    }
    return
  }
  func.func @transform_0(%arg0: i32, %arg1: i32, %arg2: i32) -> (i32, i32) {
    %c0_i32 = arith.constant 0 : i32
    return %arg1, %arg2 : i32, i32
  }
  func.func @transform_1(%arg0: i32, %arg1: i32, %arg2: i32) -> (i32, i32) {
    %c0_i32 = arith.constant 0 : i32
    return %arg1, %arg2 : i32, i32
  }
  func.func @transform_2(%arg0: i32, %arg1: i32, %arg2: i32) -> (i32, i32) {
    %c0_i32 = arith.constant 0 : i32
    %c0_i32_0 = arith.constant 0 : i32
    return %arg0, %c0_i32 : i32, i32
  }
}

</mosaic_0001>

<llo_original>
// kernel: tpu_custom_call.1
$region0: #{tpu_custom_call.1}
  #allocation0 [shape = 'u32[]', space=smem, size = 0x4, offset = 0x4, fixed_abs, tag = 'smem constant byte address 0x4 - core index']
  #allocation1 [shape = 'u32[72,128]{1,0:T(1,128)}', space=vmem, size = 0x9000, scoped, tag = 'internal scratch']
  #allocation2 [shape = 'f32[8,256]{1,0:T(8,128)}', space=vmem, size = 0x2000, scoped, tag = 'scratch operand']
  %s0 = inlined_call_operand.hbm [shape: f32[8,256], index: 0, kind: input, shape index: {}]
  %s1 = inlined_call_operand.hbm [shape: f32[8,256], index: 1, kind: input, shape index: {}]
  %s2 = inlined_call_operand.hbm [shape: f32[1,1], index: 2, kind: output, shape index: {}]
  %s3 = sld [smem:[#allocation0]]
  $region34: #{tpu_custom_call.1} parent=0
    _
  %s5 = ssub.s32 1, %s3
  %s6 = scalar_select 0, %s5, %s3
  $region1: #{tpu_custom_call.1} parent=0
    #allocation3 [shape = 'u8[8192]{0}', space=vmem, size = 0x2000, scoped, tag = 'input window, operand 0, single buffered']
    #allocation4 [shape = 's32[1]{0}', space=sflag, size = 0x4, scoped, tag = 'scoped memory for tpu_custom_call.1']
    #allocation5 [shape = 's32[1]{0}', space=sflag, size = 0x4, scoped, tag = 'scoped memory for tpu_custom_call.1']
    #allocation6 [shape = 'u8[8192]{0}', space=vmem, size = 0x2000, scoped, tag = 'input window, operand 1, single buffered']
    #allocation7 [shape = 's32[1]{0}', space=sflag, size = 0x4, scoped, tag = 'scoped memory for tpu_custom_call.1']
    #allocation8 [shape = 'u8[512]{0}', space=smem, size = 0x200, scoped, tag = 'output window, operand 0, single buffered']
    %7 = vsyncpa [#allocation4], 0
    %8 = vsyncpa [#allocation7], 0
    %9 = vsyncpa [#allocation5], 0
    // Predicated region
    $region2: #{tpu_custom_call.1} parent=1 // pred_check
      _
    $region3: #{tpu_custom_call.1} parent=1 // pred_check_branch
      %11 = sbr.rel (0) target = $region5
    $region4: #{tpu_custom_call.1} parent=1 // pred_region
      %13 = vsyncadd [#allocation4], 0
      %s15 = sshll.u32 %s0, 4
      %s16 = int_to_ptr.hbm [resolvable:$true] %s15
      %s17 = sshll.u32 [#allocation3], 4
      %s18 = int_to_ptr.vmem [resolvable:$true] %s17
      %20 = dma.hbm_to_vmem [thread:$0]  %s16, 256, %s18, [#allocation4]
    $region5: #{tpu_custom_call.1} parent=1 // pred_fallthru
      _
    // Predicated region
    $region6: #{tpu_custom_call.1} parent=1 // pred_check
      _
    $region7: #{tpu_custom_call.1} parent=1 // pred_check_branch
      %22 = sbr.rel (0) target = $region9
    $region8: #{tpu_custom_call.1} parent=1 // pred_region
      %24 = vsyncadd [#allocation7], 0
      %s26 = sshll.u32 %s1, 4
      %s27 = int_to_ptr.hbm [resolvable:$true] %s26
      %s28 = sshll.u32 [#allocation6], 4
      %s29 = int_to_ptr.vmem [resolvable:$true] %s28
      %31 = dma.hbm_to_vmem [thread:$0]  %s27, 256, %s29, [#allocation7]
    $region9: #{tpu_custom_call.1} parent=1 // pred_fallthru
      _
    // Predicated region
    $region10: #{tpu_custom_call.1} parent=1 // pred_check
      _
    $region11: #{tpu_custom_call.1} parent=1 // pred_check_branch
      %33 = sbr.rel (0) target = $region13
    $region12: #{tpu_custom_call.1} parent=1 // pred_region
      %35 = dma.done [#allocation4], 256
    $region13: #{tpu_custom_call.1} parent=1 // pred_fallthru
      _
    // Predicated region
    $region14: #{tpu_custom_call.1} parent=1 // pred_check
      _
    $region15: #{tpu_custom_call.1} parent=1 // pred_check_branch
      %37 = sbr.rel (0) target = $region17
    $region16: #{tpu_custom_call.1} parent=1 // pred_region
      %39 = dma.done [#allocation7], 256
    $region17: #{tpu_custom_call.1} parent=1 // pred_fallthru
      _
    %p40 = scmp.eq.s32.totalorder 0, 0
    %p41 = scmp.eq.s32.totalorder 0, 0
    %p42 = pnand %p40, %p41
    %p43 = pneg %p42
    // Predicated region
    $region18: #{tpu_custom_call.1} parent=1 // pred_check
      _
    $region19: #{tpu_custom_call.1} parent=1 // pred_check_branch
      %45 = sbr.rel (%p42) target = $region21
    $region20: #{tpu_custom_call.1} parent=1 // pred_region
      %46 = vst [vmem:[#allocation2] sm:$0xff] 0.0
      %47 = vst [vmem:[#allocation2 + $0x8] sm:$0xff] 0.0
    $region21: #{tpu_custom_call.1} parent=1 // pred_fallthru
      _
    %v48 = vld [vmem:[#allocation3] sm:$0xff]
    %v49 = vld [vmem:[#allocation3 + $0x8] sm:$0xff]
    %v50 = vld [vmem:[#allocation6] sm:$0xff]
    %v51 = vld [vmem:[#allocation6 + $0x8] sm:$0xff]
    %v52 = vlog2.pop %v48
    %v53 = vmul.f32 %v52, 0.6931472
    %v54 = vlog2.pop %v49
    %v55 = vmul.f32 %v54, 0.6931472
    %v56 = vmax.f32 %v53, -100.0
    %v57 = vmax.f32 %v55, -100.0
    %v58 = vsub.f32 1.0, %v48
    %v59 = vsub.f32 1.0, %v49
    %v60 = vlog2.pop %v58
    %v61 = vmul.f32 %v60, 0.6931472
    %v62 = vlog2.pop %v59
    %v63 = vmul.f32 %v62, 0.6931472
    %v64 = vmax.f32 %v61, -100.0
    %v65 = vmax.f32 %v63, -100.0
    %v66 = vld [vmem:[#allocation2] sm:$0xff]
    %v67 = vld [vmem:[#allocation2 + $0x8] sm:$0xff]
    %v68 = vsub.f32 %v56, %v64
    %v69 = vsub.f32 %v57, %v65
    %v70 = vmul.f32 %v50, %v68
    %v71 = vmul.f32 %v51, %v69
    %v72 = vadd.f32 %v64, %v70
    %v73 = vadd.f32 %v65, %v71
    %v74 = vadd.f32 %v66, %v72
    %v75 = vadd.f32 %v67, %v73
    %76 = vst [vmem:[#allocation2] sm:$0xff] %v74
    %77 = vst [vmem:[#allocation2 + $0x8] sm:$0xff] %v75
    // Predicated region
    $region22: #{tpu_custom_call.1} parent=1 // pred_check
      _
    $region23: #{tpu_custom_call.1} parent=1 // pred_check_branch
      %79 = sbr.rel (%p42) target = $region25
    $region24: #{tpu_custom_call.1} parent=1 // pred_region
      %v80 = vld [vmem:[#allocation2] sm:$0xff]
      %v81 = vld [vmem:[#allocation2 + $0x8] sm:$0xff]
      %v82 = vadd.f32 %v80, %v81
      %83 = vadd.xlane.f32.xlu0 %v82
      %v84 = vpop.xlane.xlu0 %83
      %v85 = vrot.slane %v84, 4
      %v86 = vadd.f32 %v84, %v85
      %v87 = vrot.slane %v86, 2
      %v88 = vadd.f32 %v86, %v87
      %v89 = vrot.slane %v88, 1
      %v90 = vadd.f32 %v88, %v89
      %s91 = vtos %v90
      %s92 = scalar_lea.smem [#allocation8], 0
      %93 = sst [smem:[%s92]] %s91
    $region25: #{tpu_custom_call.1} parent=1 // pred_fallthru
      _
    // Predicated region
    $region26: #{tpu_custom_call.1} parent=1 // pred_check
      _
    $region27: #{tpu_custom_call.1} parent=1 // pred_check_branch
      %95 = sbr.rel (0) target = $region29
    $region28: #{tpu_custom_call.1} parent=1 // pred_region
      %97 = vsyncadd [#allocation5], 0
      %s99 = sshll.u32 %s2, 4
      %s100 = int_to_ptr.hbm [resolvable:$true] %s99
      %102 = dma.smem_to_hbm [#allocation8], 16, %s100, [#allocation5]
    $region29: #{tpu_custom_call.1} parent=1 // pred_fallthru
      _
    // Predicated region
    $region30: #{tpu_custom_call.1} parent=1 // pred_check
      _
    $region31: #{tpu_custom_call.1} parent=1 // pred_check_branch
      %104 = sbr.rel (0) target = $region33
    $region32: #{tpu_custom_call.1} parent=1 // pred_region
      %106 = dma.done [#allocation5], 16
    $region33: #{tpu_custom_call.1} parent=1 // pred_fallthru
      _
    %107 = sfence
    %108 = vsyncpa [#allocation4], 1
    %109 = vsyncpa [#allocation7], 1
    %110 = vsyncpa [#allocation5], 1

</llo_original>
